<compile_context>
chip_gen: v6e
topology: v6e:2x2x1
jax: 0.10.0
libtpu: 0.0.40
codegen_flags: <defaults>
</compile_context>

<pallas_src>
import math

import numpy as np
import jax
import jax.numpy as jnp
from jax.experimental import pallas as pl
from jax.experimental.pallas import tpu as pltpu


_MIN_PARALLEL_STEPS = 8  # keep >= this many grid steps so both v7x TCs get work


def _cdiv(a: int, b: int) -> int:
    return -(-a // b)


def _vmem_params():
    """Generation-aware per-side tile budget and scoped-VMEM limit."""
    cap = None
    try:
        cap = getattr(pltpu.get_tpu_info(), "vmem_capacity_bytes", None)
    except Exception:
        cap = None
    if not cap or cap <= 0:
        cap = 64 * 1024 * 1024            # conservative (v7x-sized) default
    # in-tile + out-tile, double buffered => ~4x the per-side budget in flight,
    # plus Mosaic relayout temporaries; stay well inside the physical capacity.
    budget = max(2 * 1024 * 1024, cap // 16)      # v7x: 4 MiB, v5e/v6e: 8 MiB
    vmem_limit = min((cap * 3) // 4, 112 * 1024 * 1024)
    return int(budget), int(vmem_limit), int(cap)


def _clamp_vmem_limit(tile_bytes: int, vmem_limit: int, cap: int) -> int:
    # in + out tiles, double buffered, plus slack for relayout temporaries.
    needed = 4 * tile_bytes + (8 << 20)
    return int(min(max(vmem_limit, needed), (cap * 9) // 10))


def _grow_once(t: int, dim: int):
    """Next legal tile size along a dim: double it, or jump to the full dim
    (a block equal to the full dim is always legal regardless of alignment)."""
    if t >= dim:
        return None
    nt = 2 * t
    return dim if nt >= dim else nt


def _choose_mn_tiles(M, N, align_m, align_n, bytes_per_mn_elem, budget, steps_of):
    """Pick (tm, tn): start at the smallest legal tiles and grow in a balanced
    way (smaller side first, to balance read/write DMA run lengths) while
    (a) the per-side tile stays under `budget` bytes and (b) the grid keeps at
    least _MIN_PARALLEL_STEPS steps (megacore coverage on v7x)."""
    tm = M if align_m >= M else align_m
    tn = N if align_n >= N else align_n

    def fits(a, b):
        return a * b * bytes_per_mn_elem <= budget

    while True:
        grew = False
        for name, cur, dim in sorted((("m", tm, M), ("n", tn, N)),
                                     key=lambda z: z[1]):
            nxt = _grow_once(cur, dim)
            if nxt is None:
                continue
            cand_tm = nxt if name == "m" else tm
            cand_tn = nxt if name == "n" else tn
            if not fits(cand_tm, cand_tn):
                continue
            if (steps_of(tm, tn) >= _MIN_PARALLEL_STEPS
                    and steps_of(cand_tm, cand_tn) < _MIN_PARALLEL_STEPS):
                continue  # don't starve the second TensorCore on v7x
            tm, tn = cand_tm, cand_tn
            grew = True
            break
        if not grew:
            return tm, tn


# ----------------------------- kernels --------------------------------------


def _kernel_3d(x_ref, o_ref):
    # (1, tm, tn) -> (1, tn, tm): trailing-2D lane transpose (XLU).
    o_ref[...] = jnp.transpose(x_ref[...], (0, 2, 1))


def _kernel_5d(x_ref, o_ref):
    # (1, tm, B, tn, tc) -> (1, tn, B, tm, tc); lane axis (tc) untouched:
    # pure sublane relocation inside VMEM.
    o_ref[...] = jnp.transpose(x_ref[...], (0, 3, 2, 1, 4))


def _make_folded_kernel(tm, tn, B, C):
    """Kernel for the lane-folded path: (1, tm, B, tn*C) -> (1, tn, B, tm*C)."""
    def kernel(x_ref, o_ref):
        x = x_ref[...]
        if C == 1:
            o_ref[...] = jnp.transpose(x, (0, 3, 2, 1))
        else:
            x = x.reshape(1, tm, B, tn, C)            # unflatten tn*C -> (tn, C)
            x = jnp.transpose(x, (0, 3, 2, 1, 4))     # swap tm <-> tn, C rides along
            o_ref[...] = x.reshape(1, tn, B, tm * C)  # flatten (tm, C) -> tm*C
    return kernel


# ----------------------------- pallas_call builders --------------------------


def _folded_call(x, A, M, B, N, C, itemsize, cost, budget, vmem_limit, cap):
    """Lane-fold path (C < 128): (A, M, B, N*C) -> (A, N, B, M*C)."""
    # tm*C / tn*C must be multiples of 128 (or the full dim) for lane density
    # and the (8, 128) block rule on the folded lane axes.
    align = 128 // math.gcd(C, 128)
    per_elem = B * C * itemsize

    def steps_of(a_tm, a_tn):
        return A * _cdiv(M, a_tm) * _cdiv(N, a_tn)

    tm, tn = _choose_mn_tiles(M, N, align, align, per_elem, budget, steps_of)
    vlimit = _clamp_vmem_limit(tm * tn * per_elem, vmem_limit, cap)
    grid = (A, _cdiv(N, tn), _cdiv(M, tm))  # innermost axis advances output M*C
    params = pltpu.CompilerParams(
        dimension_semantics=("parallel", "parallel", "parallel"),
        vmem_limit_bytes=vlimit)

    if B == 1 and C == 1:
        # Pure per-A-slice 2-D lane transpose: (A, M, N) -> (A, N, M).
        return pl.pallas_call(
            _kernel_3d,
            out_shape=jax.ShapeDtypeStruct((A, N, M), x.dtype),
            grid=grid,
            in_specs=[pl.BlockSpec((1, tm, tn), lambda a, j, i: (a, i, j))],
            out_specs=pl.BlockSpec((1, tn, tm), lambda a, j, i: (a, j, i)),
            compiler_params=params,
            cost_estimate=cost,
        )(x.reshape(A, M, N))

    kernel = _make_folded_kernel(tm, tn, B, C)
    return pl.pallas_call(
        kernel,
        out_shape=jax.ShapeDtypeStruct((A, N, B, M * C), x.dtype),
        grid=grid,
        in_specs=[pl.BlockSpec((1, tm, B, tn * C),
                               lambda a, j, i: (a, i, 0, j))],
        out_specs=pl.BlockSpec((1, tn, B, tm * C),
                               lambda a, j, i: (a, j, 0, i)),
        compiler_params=params,
        cost_estimate=cost,
    )(x.reshape(A, M, B, N * C))


def _unfolded_call(x, A, M, B, N, C, itemsize, cost, budget, vmem_limit, cap):
    """Unfolded 5-D path: (A, M, B, N, C) -> (A, N, B, M, C); lane axis kept."""
    min_tm, min_tn = min(8, M), min(8, N)
    if C <= 128:
        tc = C
    else:
        # Largest multiple of 128 (capped at C) that still lets a minimal
        # (min_tm x B x min_tn x tc) tile fit the per-side budget.
        max_tc = budget // max(1, min_tm * min_tn * B * itemsize)
        tc = max(128, (max_tc // 128) * 128)
        tc = C if tc >= C else tc
    ct = _cdiv(C, tc)
    per_elem = B * tc * itemsize

    def steps_of(a_tm, a_tn):
        return A * _cdiv(M, a_tm) * _cdiv(N, a_tn) * ct

    tm, tn = _choose_mn_tiles(M, N, 8, 8, per_elem, budget, steps_of)
    vlimit = _clamp_vmem_limit(tm * tn * per_elem, vmem_limit, cap)
    grid = (A, _cdiv(N, tn), _cdiv(M, tm), ct)  # innermost advances output C, then M

    return pl.pallas_call(
        _kernel_5d,
        out_shape=jax.ShapeDtypeStruct((A, N, B, M, C), x.dtype),
        grid=grid,
        in_specs=[pl.BlockSpec((1, tm, B, tn, tc),
                               lambda a, j, i, k: (a, i, 0, j, k))],
        out_specs=pl.BlockSpec((1, tn, B, tm, tc),
                               lambda a, j, i, k: (a, j, 0, i, k)),
        compiler_params=pltpu.CompilerParams(
            dimension_semantics=("parallel",) * 4,
            vmem_limit_bytes=vlimit),
        cost_estimate=cost,
    )(x.reshape(A, M, B, N, C))


# ----------------------------- public wrapper --------------------------------


def pallas_transpose(x, dim0: int, dim1: int):
    """Equivalent of torch.Tensor.transpose(dim0, dim1) (jnp.swapaxes)."""
    ndim = x.ndim
    d0 = dim0 % ndim
    d1 = dim1 % ndim
    if d0 == d1:
        return x
    d0, d1 = sorted((d0, d1))

    shape = x.shape
    A = int(np.prod(shape[:d0], dtype=np.int64))
    M = int(shape[d0])
    B = int(np.prod(shape[d0 + 1:d1], dtype=np.int64))
    N = int(shape[d1])
    C = int(np.prod(shape[d1 + 1:], dtype=np.int64))
    out_shape_full = shape[:d0] + (N,) + shape[d0 + 1:d1] + (M,) + shape[d1 + 1:]

    # Degenerate swaps are pure relabelings: no data movement required.
    if x.size == 0 or (M == 1 and N == 1) or (B == 1 and (M == 1 or N == 1)):
        return x.reshape(out_shape_full)

    itemsize = int(np.dtype(x.dtype).itemsize)
    # Pure memory traffic: read everything once, write everything once.
    cost = pl.CostEstimate(flops=0, transcendentals=0,
                           bytes_accessed=2 * int(x.size) * itemsize)
    budget, vmem_limit, cap = _vmem_params()

    if C < 128:
        # Lane-fold path: fold the short trailing C into the lane axis so that
        # loads/stores are lane-dense and HBM DMA runs are tm*C / tn*C long.
        try:
            out = _folded_call(x, A, M, B, N, C, itemsize, cost,
                               budget, vmem_limit, cap)
            return out.reshape(out_shape_full)
        except Exception:
            # If Mosaic cannot lower the in-kernel lane split/merge for this
            # shape/dtype, fall back to the always-correct unfolded path.
            # (Only effective when called eagerly, as in this script.)
            pass

    out = _unfolded_call(x, A, M, B, N, C, itemsize, cost,
                         budget, vmem_limit, cap)
    return out.reshape(out_shape_full)


if __name__ == "__main__":
    key = jax.random.PRNGKey(0)

    # Module config: Transpose(dim0=1, dim1=2) on an NCHW-style input
    # (C = 16 < 128 -> lane-fold path).
    dim0, dim1 = 1, 2
    x = jax.random.normal(key, (2, 4, 16, 16), dtype=jnp.float32)
    y = pallas_transpose(x, dim0, dim1)
    jax.block_until_ready(y)
    ref = jnp.swapaxes(x, dim0, dim1)
    assert y.shape == ref.shape, (y.shape, ref.shape)
    np.testing.assert_array_equal(np.asarray(y), np.asarray(ref))

    # Lane-axis transpose (C == 1, B == 1 -> pure 2-D XLU path), negative dims.
    x2 = jax.random.normal(jax.random.PRNGKey(0), (2, 128, 128),
                           dtype=jnp.float32)
    y2 = pallas_transpose(x2, -2, -1)
    jax.block_until_ready(y2)
    ref2 = jnp.swapaxes(x2, -2, -1)
    assert y2.shape == ref2.shape, (y2.shape, ref2.shape)
    np.testing.assert_array_equal(np.asarray(y2), np.asarray(ref2))

    # Large trailing C (C = 1024 >= 128 -> unfolded 5-D path, lane untouched).
    x3 = jax.random.normal(jax.random.PRNGKey(0), (2, 4, 8, 128),
                           dtype=jnp.float32)
    y3 = pallas_transpose(x3, 0, 1)
    jax.block_until_ready(y3)
    ref3 = jnp.swapaxes(x3, 0, 1)
    assert y3.shape == ref3.shape, (y3.shape, ref3.shape)
    np.testing.assert_array_equal(np.asarray(y3), np.asarray(ref3))

    print("KERNEL_OK")
</pallas_src>

<mosaic_0001>
module attributes {stable_mosaic.version = 11 : i64} {
  func.func @kernel(%arg0: i32, %arg1: i32, %arg2: i32, %arg3: memref<1x4x1x256xf32, #tpu.memory_space<vmem>>, %arg4: memref<1x16x1x64xf32, #tpu.memory_space<vmem>>) attributes {dimension_semantics = [#tpu.dimension_semantics<parallel>, #tpu.dimension_semantics<parallel>, #tpu.dimension_semantics<parallel>], iteration_bounds = array<i64: 2, 1, 1>, scalar_prefetch = 0 : i64, scratch_operands = 0 : i64, tpu.core_type = #tpu.core_type<tc>, window_params = [{transform_indices = @transform_0, window_bounds = array<i64: 1, 4, 1, 256>}, {transform_indices = @transform_1, window_bounds = array<i64: 1, 16, 1, 64>}]} {
    %c0 = arith.constant 0 : index
    %c0_0 = arith.constant 0 : index
    %c0_1 = arith.constant 0 : index
    %c0_2 = arith.constant 0 : index
    %0 = vector.load %arg3[%c0, %c0_0, %c0_1, %c0_2] : memref<1x4x1x256xf32, #tpu.memory_space<vmem>>, vector<1x4x1x256xf32>
    %1 = vector.shape_cast %0 : vector<1x4x1x256xf32> to vector<1x4x1x16x16xf32>
    %2 = tpu.transpose %1, [0, 3, 2, 1, 4] : vector<1x4x1x16x16xf32> -> vector<1x16x1x4x16xf32>
    %3 = vector.shape_cast %2 : vector<1x16x1x4x16xf32> to vector<1x16x1x64xf32>
    %c0_3 = arith.constant 0 : index
    %c0_4 = arith.constant 0 : index
    %c0_5 = arith.constant 0 : index
    %c0_6 = arith.constant 0 : index
    %4 = vector.load %arg4[%c0_3, %c0_4, %c0_5, %c0_6] : memref<1x16x1x64xf32, #tpu.memory_space<vmem>>, vector<1x16x1x64xf32>
    tpu.vector_store %arg4[%c0_3, %c0_4, %c0_5, %c0_6], %3 {strides = array<i32>} : memref<1x16x1x64xf32, #tpu.memory_space<vmem>>, vector<1x16x1x64xf32>,
    return
  }
  func.func @transform_0(%arg0: i32, %arg1: i32, %arg2: i32) -> (i32, i32, i32, i32) {
    %c0_i32 = arith.constant 0 : i32
    %c0_i32_0 = arith.constant 0 : i32
    return %arg0, %arg2, %c0_i32, %arg1 : i32, i32, i32, i32
  }
  func.func @transform_1(%arg0: i32, %arg1: i32, %arg2: i32) -> (i32, i32, i32, i32) {
    %c0_i32 = arith.constant 0 : i32
    %c0_i32_0 = arith.constant 0 : i32
    return %arg0, %arg1, %c0_i32, %arg2 : i32, i32, i32, i32
  }
}

module attributes {stable_mosaic.version = 11 : i64} {
  func.func @_kernel_5d(%arg0: i32, %arg1: i32, %arg2: i32, %arg3: i32, %arg4: memref<1x4x1x16x16xf32, #tpu.memory_space<vmem>>, %arg5: memref<1x16x1x4x16xf32, #tpu.memory_space<vmem>>) attributes {dimension_semantics = [#tpu.dimension_semantics<parallel>, #tpu.dimension_semantics<parallel>, #tpu.dimension_semantics<parallel>, #tpu.dimension_semantics<parallel>], iteration_bounds = array<i64: 2, 1, 1, 1>, scalar_prefetch = 0 : i64, scratch_operands = 0 : i64, tpu.core_type = #tpu.core_type<tc>, window_params = [{transform_indices = @transform_0, window_bounds = array<i64: 1, 4, 1, 16, 16>}, {transform_indices = @transform_1, window_bounds = array<i64: 1, 16, 1, 4, 16>}]} {
    %c0 = arith.constant 0 : index
    %c0_0 = arith.constant 0 : index
    %c0_1 = arith.constant 0 : index
    %c0_2 = arith.constant 0 : index
    %c0_3 = arith.constant 0 : index
    %0 = vector.load %arg4[%c0, %c0_0, %c0_1, %c0_2, %c0_3] : memref<1x4x1x16x16xf32, #tpu.memory_space<vmem>>, vector<1x4x1x16x16xf32>
    %1 = tpu.transpose %0, [0, 3, 2, 1, 4] : vector<1x4x1x16x16xf32> -> vector<1x16x1x4x16xf32>
    %c0_4 = arith.constant 0 : index
    %c0_5 = arith.constant 0 : index
    %c0_6 = arith.constant 0 : index
    %c0_7 = arith.constant 0 : index
    %c0_8 = arith.constant 0 : index
    %2 = vector.load %arg5[%c0_4, %c0_5, %c0_6, %c0_7, %c0_8] : memref<1x16x1x4x16xf32, #tpu.memory_space<vmem>>, vector<1x16x1x4x16xf32>
    tpu.vector_store %arg5[%c0_4, %c0_5, %c0_6, %c0_7, %c0_8], %1 {strides = array<i32>} : memref<1x16x1x4x16xf32, #tpu.memory_space<vmem>>, vector<1x16x1x4x16xf32>,
    return
  }
  func.func @transform_0(%arg0: i32, %arg1: i32, %arg2: i32, %arg3: i32) -> (i32, i32, i32, i32, i32) {
    %c0_i32 = arith.constant 0 : i32
    %c0_i32_0 = arith.constant 0 : i32
    return %arg0, %arg2, %c0_i32, %arg1, %arg3 : i32, i32, i32, i32, i32
  }
  func.func @transform_1(%arg0: i32, %arg1: i32, %arg2: i32, %arg3: i32) -> (i32, i32, i32, i32, i32) {
    %c0_i32 = arith.constant 0 : i32
    %c0_i32_0 = arith.constant 0 : i32
    return %arg0, %arg1, %c0_i32, %arg2, %arg3 : i32, i32, i32, i32, i32
  }
}

</mosaic_0001>

<llo_original>
// kernel: tpu_custom_call.1
$region0: #{tpu_custom_call.1}
  #allocation0 [shape = 'u32[]', space=smem, size = 0x4, offset = 0x4, fixed_abs, tag = 'smem constant byte address 0x4 - core index']
  #allocation1 [shape = 'u32[144,128]{1,0:T(1,128)}', space=vmem, size = 0x12000, scoped, tag = 'internal scratch']
  %s0 = inlined_call_operand.hbm [shape: f32[2,4,1,256], index: 0, kind: input, shape index: {}]
  %s1 = inlined_call_operand.hbm [shape: f32[2,16,1,64], index: 1, kind: output, shape index: {}]
  %s2 = sld [smem:[#allocation0]]
  $region41: #{tpu_custom_call.1} parent=0
    _
  %s4 = ssub.s32 1, %s2
  %s5 = scalar_select 0, %s4, %s2
  $region1: #{tpu_custom_call.1} parent=0
    #allocation2 [shape = 'u8[8192]{0}', space=vmem, size = 0x2000, scoped, tag = 'input window, operand 0']
    #allocation3 [shape = 's32[2]{0}', space=sflag, size = 0x8, scoped, tag = 'scoped memory for tpu_custom_call.1']
    #allocation4 [shape = 's32[2]{0}', space=sflag, size = 0x8, scoped, tag = 'scoped memory for tpu_custom_call.1']
    #allocation5 [shape = 'u8[16384]{0}', space=vmem, size = 0x4000, scoped, tag = 'output window, operand 0']
    %6 = vsyncpa [#allocation3], 0
    %s7 = scalar_lea.sflag [#allocation3], 1
    %8 = vsyncpa %s7, 0
    %9 = vsyncpa [#allocation4], 0
    %s10 = scalar_lea.sflag [#allocation4], 1
    %11 = vsyncpa %s10, 0
    loop: start=0, step=1, limit=4
    $region2: #{tpu_custom_call.1} parent=1 // loop_pre_header
      _
    $region3: #{tpu_custom_call.1} parent=1 // loop_header
      %s13 = sphi 0, %s17
      %p14 = scmp.ge.s32.totalorder %s13, 4
      %s20 = sphi 0, %s39
      %s21 = sphi 0, %s35
      %s22 = sphi 0, %s31
      %s23 = sphi 0, %s20
      %s24 = sphi 0, %s21
      %s25 = sphi 0, %s22
      %s26 = sphi 0, %s23
      %s27 = sphi 0, %s24
      %s28 = sphi 0, %s25
      %s46 = sphi 0, %s48
      %s49 = sphi 0, %s46
      %s50 = sphi 0, %s49
      %s66 = sphi 0, %s50
      %s76 = sphi 0, %s78
      %s79 = sphi 0, %s76
      %s80 = sphi 0, %s79
      %s96 = sphi 0, %s80
    $region4: #{tpu_custom_call.1} parent=1 // loop_header_branch
      %16 = sbr.rel (%p14) target = $region8
    $region5: #{tpu_custom_call.1} parent=1 // loop_body
      %s18 = ssub.s32 %s13, 1
      %s19 = ssub.s32 %s13, 2
      %s29 = sadd.s32 1, %s22
      %p30 = scmp.ge.s32.totalorder %s29, 1
      %s31 = scalar_select %p30, 0, %s29
      %s32 = sadd.s32 1, %s21
      %s33 = scalar_select %p30, %s32, %s21
      %p34 = scmp.ge.s32.totalorder %s33, 1
      %s35 = scalar_select %p34, 0, %s33
      %s36 = sadd.s32 1, %s20
      %s37 = scalar_select %p34, %s36, %s20
      %p38 = scmp.ge.s32.totalorder %s37, 2
      %s39 = scalar_select %p38, 0, %s37
      %s40 = ssub.s32 %s20, %s39
      %s41 = ssub.s32 %s22, %s31
      %s42 = sor.u32 %s40, %s41
      %s43 = ssub.s32 %s21, %s35
      %s44 = sor.u32 %s42, %s43
      %p45 = scmp.eq.s32.totalorder %s44, 0
      %s47 = sadd.s32 %s46, 1
      %s48 = scalar_select %p45, %s46, %s47
      %p51 = pneg %p45
      %p52 = scmp.eq.s32.totalorder %s13, 1
      %p53 = por %p51, %p52
      %p54 = scmp.ne.s32.totalorder %s46, %s49
      %p55 = scmp.eq.s32.totalorder %s13, 0
      %p56 = por %p54, %p55
      %p57 = scmp.ne.s32.totalorder %s46, %s49
      %p58 = scmp.eq.s32.totalorder %s18, 1
      %p59 = por %p57, %p58
      %p60 = scmp.ne.s32.totalorder %s49, %s50
      %p61 = scmp.eq.s32.totalorder %s18, 0
      %p62 = por %p60, %p61
      %p63 = scmp.ne.s32.totalorder %s49, %s50
      %p64 = scmp.eq.s32.totalorder %s19, 1
      %p65 = por %p63, %p64
      %p67 = scmp.ne.s32.totalorder %s50, %s66
      %p68 = scmp.eq.s32.totalorder %s19, 0
      %p69 = por %p67, %p68
      %s70 = ssub.s32 %s20, %s39
      %s71 = ssub.s32 %s21, %s35
      %s72 = sor.u32 %s70, %s71
      %s73 = ssub.s32 %s22, %s31
      %s74 = sor.u32 %s72, %s73
      %p75 = scmp.eq.s32.totalorder %s74, 0
      %s77 = sadd.s32 %s76, 1
      %s78 = scalar_select %p75, %s76, %s77
      %p81 = pneg %p75
      %p82 = scmp.eq.s32.totalorder %s13, 1
      %p83 = por %p81, %p82
      %p84 = scmp.ne.s32.totalorder %s76, %s79
      %p85 = scmp.eq.s32.totalorder %s13, 0
      %p86 = por %p84, %p85
      %p87 = scmp.ne.s32.totalorder %s76, %s79
      %p88 = scmp.eq.s32.totalorder %s18, 1
      %p89 = por %p87, %p88
      %p90 = scmp.ne.s32.totalorder %s79, %s80
      %p91 = scmp.eq.s32.totalorder %s18, 0
      %p92 = por %p90, %p91
      %p93 = scmp.ne.s32.totalorder %s79, %s80
      %p94 = scmp.eq.s32.totalorder %s19, 1
      %p95 = por %p93, %p94
      %p97 = scmp.ne.s32.totalorder %s80, %s96
      %p98 = scmp.eq.s32.totalorder %s19, 0
      %p99 = por %p97, %p98
      %p100 = scmp.le.s32.totalorder 1, %s13
      %p101 = scmp.lt.s32.totalorder %s13, 3
      %p102 = pnand %p100, %p101
      %p103 = pneg %p102
      // Predicated region
      $region9: #{tpu_custom_call.1} parent=5 // pred_check
        _
      $region10: #{tpu_custom_call.1} parent=5 // pred_check_branch
        %105 = sbr.rel (%p102) target = $region12
      $region11: #{tpu_custom_call.1} parent=5 // pred_region
        %s106 = ssub.s32 %s13, 1
      $region12: #{tpu_custom_call.1} parent=5 // pred_fallthru
        _
      %p107 = scmp.lt.s32.totalorder %s13, 2
      // Predicated region
      $region13: #{tpu_custom_call.1} parent=5 // pred_check
        %p108 = pneg %p107
      $region14: #{tpu_custom_call.1} parent=5 // pred_check_branch
        %110 = sbr.rel (%p108) target = $region16
      $region15: #{tpu_custom_call.1} parent=5 // pred_region
        // Predicated region
        $region17: #{tpu_custom_call.1} parent=15 // pred_check
          %p111 = pneg %p56
        $region18: #{tpu_custom_call.1} parent=15 // pred_check_branch
          %113 = sbr.rel (%p111) target = $region20
        $region19: #{tpu_custom_call.1} parent=15 // pred_region
          %s114 = sand.u32 %s46, 1
          %s115 = scalar_lea.sflag [#allocation3], %s114
          %s116 = sand.u32 %s46, 1
          %s117 = smul.addr %s116, 8
          %s118 = scalar_lea.vmem [#allocation2], %s117
          %s119 = smul.u32 4, %s22
          %s120 = smul.u32 2, %s21
          %s122 = ssub.s32 128, 128
          %123 = vsyncadd %s115, %s122
          %s124 = smul.addr %s119, 2
          %s125 = sadd.s32 %s120, %s124
          %s126 = smul.addr %s20, 8
          %s127 = sadd.s32 %s125, %s126
          %s128 = smul.addr %s127, 16
          %s129 = scalar_lea.hbm %s0, %s128
          %s130 = sshll.u32 %s118, 4
          %s131 = int_to_ptr.vmem [resolvable:$true] %s130
          %136 = dma.hbm_to_vmem [thread:$0]  %s129, 128, %s131, %s115, 32, 32, 2
        $region20: #{tpu_custom_call.1} parent=15 // pred_fallthru
          _
      $region16: #{tpu_custom_call.1} parent=5 // pred_fallthru
        _
      %p137 = scmp.le.s32.totalorder 1, %s13
      %p138 = scmp.lt.s32.totalorder %s13, 3
      %p139 = pnand %p137, %p138
      %p140 = pneg %p139
      // Predicated region
      $region21: #{tpu_custom_call.1} parent=5 // pred_check
        _
      $region22: #{tpu_custom_call.1} parent=5 // pred_check_branch
        %142 = sbr.rel (%p139) target = $region24
      $region23: #{tpu_custom_call.1} parent=5 // pred_region
        %s143 = ssub.s32 %s13, 1
        %s144 = sand.u32 %s49, 1
        %s145 = scalar_lea.sflag [#allocation3], %s144
        %s146 = sand.u32 %s49, 1
        %s147 = smul.addr %s146, 8
        %s148 = scalar_lea.vmem [#allocation2], %s147
        // Predicated region
        $region25: #{tpu_custom_call.1} parent=23 // pred_check
          %p149 = pneg %p62
        $region26: #{tpu_custom_call.1} parent=23 // pred_check_branch
          %151 = sbr.rel (%p149) target = $region28
        $region27: #{tpu_custom_call.1} parent=23 // pred_region
          %152 = dma.done %s145, 128
        $region28: #{tpu_custom_call.1} parent=23 // pred_fallthru
          _
        %s153 = sand.u32 %s49, 1
        %s154 = scalar_lea.sflag [#allocation3], %s153
        %s155 = sand.u32 %s49, 1
        %s156 = smul.addr %s155, 8
        %s157 = scalar_lea.vmem [#allocation2], %s156
        %p158 = pneg %p62
        %p159 = pneg %p59
        %p160 = pneg %p92
        %p161 = pneg %p89
        %s162 = sand.u32 %s79, 1
        %s163 = scalar_lea.sflag [#allocation4], %s162
        %s164 = sand.u32 %s79, 1
        %s165 = smul.addr %s164, 16
        %s166 = scalar_lea.vmem [#allocation5], %s165
        %s167 = smul.u32 4, %s25
        %s168 = smul.u32 2, %s24
        %s169 = smul.u32 16, %s24
        %v170 = vld [vmem:[%s148] sm:$0x3]
        %v171 = vld [vmem:[%s148 + $0x2] sm:$0x3]
        %v172 = vld [vmem:[%s148 + $0x4] sm:$0x3]
        %v173 = vld [vmem:[%s148 + $0x6] sm:$0x3]
        %v178 = vrot.slane %v170, 1
        %v179 = vrot.slane %v171, 1
        %v180 = vrot.slane %v172, 1
        %v181 = vrot.slane %v173, 1
        %183 = vrot.lane.b32.xlu0 %v170, 112
        %v184 = vpop.permute.xlu0 %183
        %185 = vrot.lane.b32.xlu0 %v171, 112
        %v186 = vpop.permute.xlu0 %185
        %187 = vrot.lane.b32.xlu0 %v172, 112
        %v188 = vpop.permute.xlu0 %187
        %189 = vrot.lane.b32.xlu0 %v173, 112
        %v190 = vpop.permute.xlu0 %189
        %v191 = vrot.slane %v184, 1
        %v192 = vrot.slane %v186, 1
        %v193 = vrot.slane %v188, 1
        %v194 = vrot.slane %v190, 1
        %196 = vrot.lane.b32.xlu0 %v170, 96
        %v197 = vpop.permute.xlu0 %196
        %198 = vrot.lane.b32.xlu0 %v171, 96
        %v199 = vpop.permute.xlu0 %198
        %200 = vrot.lane.b32.xlu0 %v172, 96
        %v201 = vpop.permute.xlu0 %200
        %202 = vrot.lane.b32.xlu0 %v173, 96
        %v203 = vpop.permute.xlu0 %202
        %v204 = vrot.slane %v197, 1
        %v205 = vrot.slane %v199, 1
        %v206 = vrot.slane %v201, 1
        %v207 = vrot.slane %v203, 1
        %209 = vrot.lane.b32.xlu0 %v170, 80
        %v210 = vpop.permute.xlu0 %209
        %211 = vrot.lane.b32.xlu0 %v171, 80
        %v212 = vpop.permute.xlu0 %211
        %213 = vrot.lane.b32.xlu0 %v172, 80
        %v214 = vpop.permute.xlu0 %213
        %215 = vrot.lane.b32.xlu0 %v173, 80
        %v216 = vpop.permute.xlu0 %215
        %v217 = vrot.slane %v210, 1
        %v218 = vrot.slane %v212, 1
        %v219 = vrot.slane %v214, 1
        %v220 = vrot.slane %v216, 1
        %222 = vrot.lane.b32.xlu0 %v170, 64
        %v223 = vpop.permute.xlu0 %222
        %224 = vrot.lane.b32.xlu0 %v171, 64
        %v225 = vpop.permute.xlu0 %224
        %226 = vrot.lane.b32.xlu0 %v172, 64
        %v227 = vpop.permute.xlu0 %226
        %228 = vrot.lane.b32.xlu0 %v173, 64
        %v229 = vpop.permute.xlu0 %228
        %v230 = vrot.slane %v223, 1
        %v231 = vrot.slane %v225, 1
        %v232 = vrot.slane %v227, 1
        %v233 = vrot.slane %v229, 1
        %235 = vrot.lane.b32.xlu0 %v170, 48
        %v236 = vpop.permute.xlu0 %235
        %237 = vrot.lane.b32.xlu0 %v171, 48
        %v238 = vpop.permute.xlu0 %237
        %239 = vrot.lane.b32.xlu0 %v172, 48
        %v240 = vpop.permute.xlu0 %239
        %241 = vrot.lane.b32.xlu0 %v173, 48
        %v242 = vpop.permute.xlu0 %241
        %v243 = vrot.slane %v236, 1
        %v244 = vrot.slane %v238, 1
        %v245 = vrot.slane %v240, 1
        %v246 = vrot.slane %v242, 1
        %248 = vrot.lane.b32.xlu0 %v170, 32
        %v249 = vpop.permute.xlu0 %248
        %250 = vrot.lane.b32.xlu0 %v171, 32
        %v251 = vpop.permute.xlu0 %250
        %252 = vrot.lane.b32.xlu0 %v172, 32
        %v253 = vpop.permute.xlu0 %252
        %254 = vrot.lane.b32.xlu0 %v173, 32
        %v255 = vpop.permute.xlu0 %254
        %v256 = vrot.slane %v249, 1
        %v257 = vrot.slane %v251, 1
        %v258 = vrot.slane %v253, 1
        %v259 = vrot.slane %v255, 1
        %261 = vrot.lane.b32.xlu0 %v170, 16
        %v262 = vpop.permute.xlu0 %261
        %263 = vrot.lane.b32.xlu0 %v171, 16
        %v264 = vpop.permute.xlu0 %263
        %265 = vrot.lane.b32.xlu0 %v172, 16
        %v266 = vpop.permute.xlu0 %265
        %267 = vrot.lane.b32.xlu0 %v173, 16
        %v268 = vpop.permute.xlu0 %267
        %v269 = vrot.slane %v262, 1
        %v270 = vrot.slane %v264, 1
        %v271 = vrot.slane %v266, 1
        %v272 = vrot.slane %v268, 1
        %v281 = vlaneseq
        %v282 = vshrl.u32 %v281, 7
        %v283 = vsub.s32 0, %v282
        %v284 = vrot.slane %v171, %v283
        %v285 = vlaneseq
        %v286 = vshrl.u32 %v285, 7
        %v287 = vsub.s32 0, %v286
        %v288 = vrot.slane %v186, %v287
        %v289 = vlaneseq
        %v290 = vshrl.u32 %v289, 7
        %v291 = vsub.s32 0, %v290
        %v292 = vrot.slane %v199, %v291
        %v293 = vlaneseq
        %v294 = vshrl.u32 %v293, 7
        %v295 = vsub.s32 0, %v294
        %v296 = vrot.slane %v212, %v295
        %v297 = vlaneseq
        %v298 = vshrl.u32 %v297, 7
        %v299 = vsub.s32 0, %v298
        %v300 = vrot.slane %v225, %v299
        %v301 = vlaneseq
        %v302 = vshrl.u32 %v301, 7
        %v303 = vsub.s32 0, %v302
        %v304 = vrot.slane %v238, %v303
        %v305 = vlaneseq
        %v306 = vshrl.u32 %v305, 7
        %v307 = vsub.s32 0, %v306
        %v308 = vrot.slane %v251, %v307
        %v309 = vlaneseq
        %v310 = vshrl.u32 %v309, 7
        %v311 = vsub.s32 0, %v310
        %v312 = vrot.slane %v264, %v311
        %v313 = vlaneseq
        %v314 = vshrl.u32 %v313, 7
        %v315 = vsub.s32 0, %v314
        %v316 = vrot.slane %v179, %v315
        %v317 = vlaneseq
        %v318 = vshrl.u32 %v317, 7
        %v319 = vsub.s32 0, %v318
        %v320 = vrot.slane %v192, %v319
        %v321 = vlaneseq
        %v322 = vshrl.u32 %v321, 7
        %v323 = vsub.s32 0, %v322
        %v324 = vrot.slane %v205, %v323
        %v325 = vlaneseq
        %v326 = vshrl.u32 %v325, 7
        %v327 = vsub.s32 0, %v326
        %v328 = vrot.slane %v218, %v327
        %v329 = vlaneseq
        %v330 = vshrl.u32 %v329, 7
        %v331 = vsub.s32 0, %v330
        %v332 = vrot.slane %v231, %v331
        %v333 = vlaneseq
        %v334 = vshrl.u32 %v333, 7
        %v335 = vsub.s32 0, %v334
        %v336 = vrot.slane %v244, %v335
        %v337 = vlaneseq
        %v338 = vshrl.u32 %v337, 7
        %v339 = vsub.s32 0, %v338
        %v340 = vrot.slane %v257, %v339
        %v341 = vlaneseq
        %v342 = vshrl.u32 %v341, 7
        %v343 = vsub.s32 0, %v342
        %v344 = vrot.slane %v270, %v343
        %345 = vrot.lane.b32.xlu0 %v284, 16
        %v346 = vpop.permute.xlu0 %345
        %347 = vrot.lane.b32.xlu0 %v288, 16
        %v348 = vpop.permute.xlu0 %347
        %349 = vrot.lane.b32.xlu0 %v292, 16
        %v350 = vpop.permute.xlu0 %349
        %351 = vrot.lane.b32.xlu0 %v296, 16
        %v352 = vpop.permute.xlu0 %351
        %353 = vrot.lane.b32.xlu0 %v300, 16
        %v354 = vpop.permute.xlu0 %353
        %355 = vrot.lane.b32.xlu0 %v304, 16
        %v356 = vpop.permute.xlu0 %355
        %357 = vrot.lane.b32.xlu0 %v308, 16
        %v358 = vpop.permute.xlu0 %357
        %359 = vrot.lane.b32.xlu0 %v312, 16
        %v360 = vpop.permute.xlu0 %359
        %361 = vrot.lane.b32.xlu0 %v316, 16
        %v362 = vpop.permute.xlu0 %361
        %363 = vrot.lane.b32.xlu0 %v320, 16
        %v364 = vpop.permute.xlu0 %363
        %365 = vrot.lane.b32.xlu0 %v324, 16
        %v366 = vpop.permute.xlu0 %365
        %367 = vrot.lane.b32.xlu0 %v328, 16
        %v368 = vpop.permute.xlu0 %367
        %369 = vrot.lane.b32.xlu0 %v332, 16
        %v370 = vpop.permute.xlu0 %369
        %371 = vrot.lane.b32.xlu0 %v336, 16
        %v372 = vpop.permute.xlu0 %371
        %373 = vrot.lane.b32.xlu0 %v340, 16
        %v374 = vpop.permute.xlu0 %373
        %375 = vrot.lane.b32.xlu0 %v344, 16
        %v376 = vpop.permute.xlu0 %375
        %v393 = vlaneseq
        %v394 = vshrl.u32 %v393, 7
        %v395 = vsub.s32 0, %v394
        %v396 = vrot.slane %v172, %v395
        %v397 = vlaneseq
        %v398 = vshrl.u32 %v397, 7
        %v399 = vsub.s32 0, %v398
        %v400 = vrot.slane %v188, %v399
        %v401 = vlaneseq
        %v402 = vshrl.u32 %v401, 7
        %v403 = vsub.s32 0, %v402
        %v404 = vrot.slane %v201, %v403
        %v405 = vlaneseq
        %v406 = vshrl.u32 %v405, 7
        %v407 = vsub.s32 0, %v406
        %v408 = vrot.slane %v214, %v407
        %v409 = vlaneseq
        %v410 = vshrl.u32 %v409, 7
        %v411 = vsub.s32 0, %v410
        %v412 = vrot.slane %v227, %v411
        %v413 = vlaneseq
        %v414 = vshrl.u32 %v413, 7
        %v415 = vsub.s32 0, %v414
        %v416 = vrot.slane %v240, %v415
        %v417 = vlaneseq
        %v418 = vshrl.u32 %v417, 7
        %v419 = vsub.s32 0, %v418
        %v420 = vrot.slane %v253, %v419
        %v421 = vlaneseq
        %v422 = vshrl.u32 %v421, 7
        %v423 = vsub.s32 0, %v422
        %v424 = vrot.slane %v266, %v423
        %v425 = vlaneseq
        %v426 = vshrl.u32 %v425, 7
        %v427 = vsub.s32 0, %v426
        %v428 = vrot.slane %v180, %v427
        %v429 = vlaneseq
        %v430 = vshrl.u32 %v429, 7
        %v431 = vsub.s32 0, %v430
        %v432 = vrot.slane %v193, %v431
        %v433 = vlaneseq
        %v434 = vshrl.u32 %v433, 7
        %v435 = vsub.s32 0, %v434
        %v436 = vrot.slane %v206, %v435
        %v437 = vlaneseq
        %v438 = vshrl.u32 %v437, 7
        %v439 = vsub.s32 0, %v438
        %v440 = vrot.slane %v219, %v439
        %v441 = vlaneseq
        %v442 = vshrl.u32 %v441, 7
        %v443 = vsub.s32 0, %v442
        %v444 = vrot.slane %v232, %v443
        %v445 = vlaneseq
        %v446 = vshrl.u32 %v445, 7
        %v447 = vsub.s32 0, %v446
        %v448 = vrot.slane %v245, %v447
        %v449 = vlaneseq
        %v450 = vshrl.u32 %v449, 7
        %v451 = vsub.s32 0, %v450
        %v452 = vrot.slane %v258, %v451
        %v453 = vlaneseq
        %v454 = vshrl.u32 %v453, 7
        %v455 = vsub.s32 0, %v454
        %v456 = vrot.slane %v271, %v455
        %457 = vrot.lane.b32.xlu0 %v396, 32
        %v458 = vpop.permute.xlu0 %457
        %459 = vrot.lane.b32.xlu0 %v400, 32
        %v460 = vpop.permute.xlu0 %459
        %461 = vrot.lane.b32.xlu0 %v404, 32
        %v462 = vpop.permute.xlu0 %461
        %463 = vrot.lane.b32.xlu0 %v408, 32
        %v464 = vpop.permute.xlu0 %463
        %465 = vrot.lane.b32.xlu0 %v412, 32
        %v466 = vpop.permute.xlu0 %465
        %467 = vrot.lane.b32.xlu0 %v416, 32
        %v468 = vpop.permute.xlu0 %467
        %469 = vrot.lane.b32.xlu0 %v420, 32
        %v470 = vpop.permute.xlu0 %469
        %471 = vrot.lane.b32.xlu0 %v424, 32
        %v472 = vpop.permute.xlu0 %471
        %473 = vrot.lane.b32.xlu0 %v428, 32
        %v474 = vpop.permute.xlu0 %473
        %475 = vrot.lane.b32.xlu0 %v432, 32
        %v476 = vpop.permute.xlu0 %475
        %477 = vrot.lane.b32.xlu0 %v436, 32
        %v478 = vpop.permute.xlu0 %477
        %479 = vrot.lane.b32.xlu0 %v440, 32
        %v480 = vpop.permute.xlu0 %479
        %481 = vrot.lane.b32.xlu0 %v444, 32
        %v482 = vpop.permute.xlu0 %481
        %483 = vrot.lane.b32.xlu0 %v448, 32
        %v484 = vpop.permute.xlu0 %483
        %485 = vrot.lane.b32.xlu0 %v452, 32
        %v486 = vpop.permute.xlu0 %485
        %487 = vrot.lane.b32.xlu0 %v456, 32
        %v488 = vpop.permute.xlu0 %487
        %v505 = vlaneseq
        %v506 = vshrl.u32 %v505, 7
        %v507 = vsub.s32 0, %v506
        %v508 = vrot.slane %v173, %v507
        %v509 = vlaneseq
        %v510 = vshrl.u32 %v509, 7
        %v511 = vsub.s32 0, %v510
        %v512 = vrot.slane %v190, %v511
        %v513 = vlaneseq
        %v514 = vshrl.u32 %v513, 7
        %v515 = vsub.s32 0, %v514
        %v516 = vrot.slane %v203, %v515
        %v517 = vlaneseq
        %v518 = vshrl.u32 %v517, 7
        %v519 = vsub.s32 0, %v518
        %v520 = vrot.slane %v216, %v519
        %v521 = vlaneseq
        %v522 = vshrl.u32 %v521, 7
        %v523 = vsub.s32 0, %v522
        %v524 = vrot.slane %v229, %v523
        %v525 = vlaneseq
        %v526 = vshrl.u32 %v525, 7
        %v527 = vsub.s32 0, %v526
        %v528 = vrot.slane %v242, %v527
        %v529 = vlaneseq
        %v530 = vshrl.u32 %v529, 7
        %v531 = vsub.s32 0, %v530
        %v532 = vrot.slane %v255, %v531
        %v533 = vlaneseq
        %v534 = vshrl.u32 %v533, 7
        %v535 = vsub.s32 0, %v534
        %v536 = vrot.slane %v268, %v535
        %v537 = vlaneseq
        %v538 = vshrl.u32 %v537, 7
        %v539 = vsub.s32 0, %v538
        %v540 = vrot.slane %v181, %v539
        %v541 = vlaneseq
        %v542 = vshrl.u32 %v541, 7
        %v543 = vsub.s32 0, %v542
        %v544 = vrot.slane %v194, %v543
        %v545 = vlaneseq
        %v546 = vshrl.u32 %v545, 7
        %v547 = vsub.s32 0, %v546
        %v548 = vrot.slane %v207, %v547
        %v549 = vlaneseq
        %v550 = vshrl.u32 %v549, 7
        %v551 = vsub.s32 0, %v550
        %v552 = vrot.slane %v220, %v551
        %v553 = vlaneseq
        %v554 = vshrl.u32 %v553, 7
        %v555 = vsub.s32 0, %v554
        %v556 = vrot.slane %v233, %v555
        %v557 = vlaneseq
        %v558 = vshrl.u32 %v557, 7
        %v559 = vsub.s32 0, %v558
        %v560 = vrot.slane %v246, %v559
        %v561 = vlaneseq
        %v562 = vshrl.u32 %v561, 7
        %v563 = vsub.s32 0, %v562
        %v564 = vrot.slane %v259, %v563
        %v565 = vlaneseq
        %v566 = vshrl.u32 %v565, 7
        %v567 = vsub.s32 0, %v566
        %v568 = vrot.slane %v272, %v567
        %569 = vrot.lane.b32.xlu0 %v508, 48
        %v570 = vpop.permute.xlu0 %569
        %571 = vrot.lane.b32.xlu0 %v512, 48
        %v572 = vpop.permute.xlu0 %571
        %573 = vrot.lane.b32.xlu0 %v516, 48
        %v574 = vpop.permute.xlu0 %573
        %575 = vrot.lane.b32.xlu0 %v520, 48
        %v576 = vpop.permute.xlu0 %575
        %577 = vrot.lane.b32.xlu0 %v524, 48
        %v578 = vpop.permute.xlu0 %577
        %579 = vrot.lane.b32.xlu0 %v528, 48
        %v580 = vpop.permute.xlu0 %579
        %581 = vrot.lane.b32.xlu0 %v532, 48
        %v582 = vpop.permute.xlu0 %581
        %583 = vrot.lane.b32.xlu0 %v536, 48
        %v584 = vpop.permute.xlu0 %583
        %585 = vrot.lane.b32.xlu0 %v540, 48
        %v586 = vpop.permute.xlu0 %585
        %587 = vrot.lane.b32.xlu0 %v544, 48
        %v588 = vpop.permute.xlu0 %587
        %589 = vrot.lane.b32.xlu0 %v548, 48
        %v590 = vpop.permute.xlu0 %589
        %591 = vrot.lane.b32.xlu0 %v552, 48
        %v592 = vpop.permute.xlu0 %591
        %593 = vrot.lane.b32.xlu0 %v556, 48
        %v594 = vpop.permute.xlu0 %593
        %595 = vrot.lane.b32.xlu0 %v560, 48
        %v596 = vpop.permute.xlu0 %595
        %597 = vrot.lane.b32.xlu0 %v564, 48
        %v598 = vpop.permute.xlu0 %597
        %599 = vrot.lane.b32.xlu0 %v568, 48
        %v600 = vpop.permute.xlu0 %599
        %vm617 = vcmask 130048
        %v618 = vsel %vm617, %v170, %v346
        %v619 = vsel %vm617, %v184, %v348
        %v620 = vsel %vm617, %v197, %v350
        %v621 = vsel %vm617, %v210, %v352
        %v622 = vsel %vm617, %v223, %v354
        %v623 = vsel %vm617, %v236, %v356
        %v624 = vsel %vm617, %v249, %v358
        %v625 = vsel %vm617, %v262, %v360
        %v626 = vsel %vm617, %v178, %v362
        %v627 = vsel %vm617, %v191, %v364
        %v628 = vsel %vm617, %v204, %v366
        %v629 = vsel %vm617, %v217, %v368
        %v630 = vsel %vm617, %v230, %v370
        %v631 = vsel %vm617, %v243, %v372
        %v632 = vsel %vm617, %v256, %v374
        %v633 = vsel %vm617, %v269, %v376
        %vm634 = vcmask 261120
        %v635 = vsel %vm634, %v618, %v458
        %v636 = vsel %vm634, %v619, %v460
        %v637 = vsel %vm634, %v620, %v462
        %v638 = vsel %vm634, %v621, %v464
        %v639 = vsel %vm634, %v622, %v466
        %v640 = vsel %vm634, %v623, %v468
        %v641 = vsel %vm634, %v624, %v470
        %v642 = vsel %vm634, %v625, %v472
        %v643 = vsel %vm634, %v626, %v474
        %v644 = vsel %vm634, %v627, %v476
        %v645 = vsel %vm634, %v628, %v478
        %v646 = vsel %vm634, %v629, %v480
        %v647 = vsel %vm634, %v630, %v482
        %v648 = vsel %vm634, %v631, %v484
        %v649 = vsel %vm634, %v632, %v486
        %v650 = vsel %vm634, %v633, %v488
        %vm651 = vcmask 392192
        %v652 = vsel %vm651, %v635, %v570
        %v653 = vsel %vm651, %v636, %v572
        %v654 = vsel %vm651, %v637, %v574
        %v655 = vsel %vm651, %v638, %v576
        %v656 = vsel %vm651, %v639, %v578
        %v657 = vsel %vm651, %v640, %v580
        %v658 = vsel %vm651, %v641, %v582
        %v659 = vsel %vm651, %v642, %v584
        %v660 = vsel %vm651, %v643, %v586
        %v661 = vsel %vm651, %v644, %v588
        %v662 = vsel %vm651, %v645, %v590
        %v663 = vsel %vm651, %v646, %v592
        %v664 = vsel %vm651, %v647, %v594
        %v665 = vsel %vm651, %v648, %v596
        %v666 = vsel %vm651, %v649, %v598
        %v667 = vsel %vm651, %v650, %v600
        %vm668 = vcmask 516096
        %669 = vst.msk [vmem:[%s166] sm:$0x1] %vm668, %v652
        %670 = vst.msk [vmem:[%s166 + $0x1] sm:$0x1] %vm668, %v653
        %671 = vst.msk [vmem:[%s166 + $0x2] sm:$0x1] %vm668, %v654
        %672 = vst.msk [vmem:[%s166 + $0x3] sm:$0x1] %vm668, %v655
        %673 = vst.msk [vmem:[%s166 + $0x4] sm:$0x1] %vm668, %v656
        %674 = vst.msk [vmem:[%s166 + $0x5] sm:$0x1] %vm668, %v657
        %675 = vst.msk [vmem:[%s166 + $0x6] sm:$0x1] %vm668, %v658
        %676 = vst.msk [vmem:[%s166 + $0x7] sm:$0x1] %vm668, %v659
        %677 = vst.msk [vmem:[%s166 + $0x8] sm:$0x1] %vm668, %v660
        %678 = vst.msk [vmem:[%s166 + $0x9] sm:$0x1] %vm668, %v661
        %679 = vst.msk [vmem:[%s166 + $0xa] sm:$0x1] %vm668, %v662
        %680 = vst.msk [vmem:[%s166 + $0xb] sm:$0x1] %vm668, %v663
        %681 = vst.msk [vmem:[%s166 + $0xc] sm:$0x1] %vm668, %v664
        %682 = vst.msk [vmem:[%s166 + $0xd] sm:$0x1] %vm668, %v665
        %683 = vst.msk [vmem:[%s166 + $0xe] sm:$0x1] %vm668, %v666
        %684 = vst.msk [vmem:[%s166 + $0xf] sm:$0x1] %vm668, %v667
        %s685 = sand.u32 %s79, 1
        %s686 = scalar_lea.sflag [#allocation4], %s685
        %s687 = sand.u32 %s79, 1
        %s688 = smul.addr %s687, 16
        %s689 = scalar_lea.vmem [#allocation5], %s688
        // Predicated region
        $region29: #{tpu_custom_call.1} parent=23 // pred_check
          %p690 = pneg %p89
        $region30: #{tpu_custom_call.1} parent=23 // pred_check_branch
          %692 = sbr.rel (%p690) target = $region32
        $region31: #{tpu_custom_call.1} parent=23 // pred_region
          %s693 = smul.u32 16, %s24
          %s695 = ssub.s32 256, 256
          %696 = vsyncadd %s686, %s695
          %s697 = sadd.s32 %s25, %s693
          %s698 = smul.addr %s23, 16
          %s699 = sadd.s32 %s697, %s698
          %s700 = smul.addr %s699, 16
          %s701 = scalar_lea.hbm %s1, %s700
          %s702 = sshll.u32 %s689, 4
          %s703 = int_to_ptr.vmem [resolvable:$true] %s702
          %708 = dma.vmem_to_hbm [thread:$0]  %s703, 256, %s701, %s686, 16, 16, 1
        $region32: #{tpu_custom_call.1} parent=23 // pred_fallthru
          _
      $region24: #{tpu_custom_call.1} parent=5 // pred_fallthru
        _
      %p709 = scmp.le.s32.totalorder 2, %s13
      // Predicated region
      $region33: #{tpu_custom_call.1} parent=5 // pred_check
        %p710 = pneg %p709
      $region34: #{tpu_custom_call.1} parent=5 // pred_check_branch
        %712 = sbr.rel (%p710) target = $region36
      $region35: #{tpu_custom_call.1} parent=5 // pred_region
        %s713 = ssub.s32 %s13, 2
        // Predicated region
        $region37: #{tpu_custom_call.1} parent=35 // pred_check
          %p714 = pneg %p95
        $region38: #{tpu_custom_call.1} parent=35 // pred_check_branch
          %716 = sbr.rel (%p714) target = $region40
        $region39: #{tpu_custom_call.1} parent=35 // pred_region
          %s717 = sand.u32 %s80, 1
          %s718 = scalar_lea.sflag [#allocation4], %s717
          %s719 = sand.u32 %s80, 1
          %s720 = smul.addr %s719, 16
          %s721 = scalar_lea.vmem [#allocation5], %s720
          %722 = dma.done %s718, 256
        $region40: #{tpu_custom_call.1} parent=35 // pred_fallthru
          _
      $region36: #{tpu_custom_call.1} parent=5 // pred_fallthru
        _
    $region6: #{tpu_custom_call.1} parent=1 // loop_footer
      %s17 = sadd.s32 1, %s13
    $region7: #{tpu_custom_call.1} parent=1 // loop_footer_branch
      %12 = sbr.rel target = $region3
    $region8: #{tpu_custom_call.1} parent=1 // loop_exit
      _
    %723 = vsyncpa [#allocation3], 1
    %s724 = scalar_lea.sflag [#allocation3], 1
    %725 = vsyncpa %s724, 1
    %726 = vsyncpa [#allocation4], 1
    %s727 = scalar_lea.sflag [#allocation4], 1
    %728 = vsyncpa %s727, 1

// kernel: tpu_custom_call.1
$region0: #{tpu_custom_call.1}
  #allocation0 [shape = 'u32[]', space=smem, size = 0x4, offset = 0x4, fixed_abs, tag = 'smem constant byte address 0x4 - core index']
  #allocation1 [shape = 'u32[144,128]{1,0:T(1,128)}', space=vmem, size = 0x12000, scoped, tag = 'internal scratch']
  %s0 = inlined_call_operand.hbm [shape: f32[2,4,1,16,16], index: 0, kind: input, shape index: {}]
  %s1 = inlined_call_operand.hbm [shape: f32[2,16,1,4,16], index: 1, kind: output, shape index: {}]
  %s2 = sld [smem:[#allocation0]]
  $region41: #{tpu_custom_call.1} parent=0
    _
  %s4 = ssub.s32 1, %s2
  %s5 = scalar_select 0, %s4, %s2
  $region1: #{tpu_custom_call.1} parent=0
    #allocation2 [shape = 'u8[65536]{0}', space=vmem, size = 0x10000, scoped, tag = 'input window, operand 0']
    #allocation3 [shape = 's32[2]{0}', space=sflag, size = 0x8, scoped, tag = 'scoped memory for tpu_custom_call.1']
    #allocation4 [shape = 's32[2]{0}', space=sflag, size = 0x8, scoped, tag = 'scoped memory for tpu_custom_call.1']
    #allocation5 [shape = 'u8[65536]{0}', space=vmem, size = 0x10000, scoped, tag = 'output window, operand 0']
    %6 = vsyncpa [#allocation3], 0
    %s7 = scalar_lea.sflag [#allocation3], 1
    %8 = vsyncpa %s7, 0
    %9 = vsyncpa [#allocation4], 0
    %s10 = scalar_lea.sflag [#allocation4], 1
    %11 = vsyncpa %s10, 0
    loop: start=0, step=1, limit=4
    $region2: #{tpu_custom_call.1} parent=1 // loop_pre_header
      _
    $region3: #{tpu_custom_call.1} parent=1 // loop_header
      %s13 = sphi 0, %s17
      %p14 = scmp.ge.s32.totalorder %s13, 4
      %s20 = sphi 0, %s46
      %s21 = sphi 0, %s42
      %s22 = sphi 0, %s38
      %s23 = sphi 0, %s34
      %s24 = sphi 0, %s20
      %s25 = sphi 0, %s21
      %s26 = sphi 0, %s22
      %s27 = sphi 0, %s23
      %s28 = sphi 0, %s24
      %s29 = sphi 0, %s25
      %s30 = sphi 0, %s26
      %s31 = sphi 0, %s27
      %s55 = sphi 0, %s57
      %s58 = sphi 0, %s55
      %s59 = sphi 0, %s58
      %s75 = sphi 0, %s59
      %s87 = sphi 0, %s89
      %s90 = sphi 0, %s87
      %s91 = sphi 0, %s90
      %s107 = sphi 0, %s91
    $region4: #{tpu_custom_call.1} parent=1 // loop_header_branch
      %16 = sbr.rel (%p14) target = $region8
    $region5: #{tpu_custom_call.1} parent=1 // loop_body
      %s18 = ssub.s32 %s13, 1
      %s19 = ssub.s32 %s13, 2
      %s32 = sadd.s32 1, %s23
      %p33 = scmp.ge.s32.totalorder %s32, 1
      %s34 = scalar_select %p33, 0, %s32
      %s35 = sadd.s32 1, %s22
      %s36 = scalar_select %p33, %s35, %s22
      %p37 = scmp.ge.s32.totalorder %s36, 1
      %s38 = scalar_select %p37, 0, %s36
      %s39 = sadd.s32 1, %s21
      %s40 = scalar_select %p37, %s39, %s21
      %p41 = scmp.ge.s32.totalorder %s40, 1
      %s42 = scalar_select %p41, 0, %s40
      %s43 = sadd.s32 1, %s20
      %s44 = scalar_select %p41, %s43, %s20
      %p45 = scmp.ge.s32.totalorder %s44, 2
      %s46 = scalar_select %p45, 0, %s44
      %s47 = ssub.s32 %s20, %s46
      %s48 = ssub.s32 %s22, %s38
      %s49 = sor.u32 %s47, %s48
      %s50 = ssub.s32 %s21, %s42
      %s51 = sor.u32 %s49, %s50
      %s52 = ssub.s32 %s23, %s34
      %s53 = sor.u32 %s51, %s52
      %p54 = scmp.eq.s32.totalorder %s53, 0
      %s56 = sadd.s32 %s55, 1
      %s57 = scalar_select %p54, %s55, %s56
      %p60 = pneg %p54
      %p61 = scmp.eq.s32.totalorder %s13, 1
      %p62 = por %p60, %p61
      %p63 = scmp.ne.s32.totalorder %s55, %s58
      %p64 = scmp.eq.s32.totalorder %s13, 0
      %p65 = por %p63, %p64
      %p66 = scmp.ne.s32.totalorder %s55, %s58
      %p67 = scmp.eq.s32.totalorder %s18, 1
      %p68 = por %p66, %p67
      %p69 = scmp.ne.s32.totalorder %s58, %s59
      %p70 = scmp.eq.s32.totalorder %s18, 0
      %p71 = por %p69, %p70
      %p72 = scmp.ne.s32.totalorder %s58, %s59
      %p73 = scmp.eq.s32.totalorder %s19, 1
      %p74 = por %p72, %p73
      %p76 = scmp.ne.s32.totalorder %s59, %s75
      %p77 = scmp.eq.s32.totalorder %s19, 0
      %p78 = por %p76, %p77
      %s79 = ssub.s32 %s20, %s46
      %s80 = ssub.s32 %s21, %s42
      %s81 = sor.u32 %s79, %s80
      %s82 = ssub.s32 %s22, %s38
      %s83 = sor.u32 %s81, %s82
      %s84 = ssub.s32 %s23, %s34
      %s85 = sor.u32 %s83, %s84
      %p86 = scmp.eq.s32.totalorder %s85, 0
      %s88 = sadd.s32 %s87, 1
      %s89 = scalar_select %p86, %s87, %s88
      %p92 = pneg %p86
      %p93 = scmp.eq.s32.totalorder %s13, 1
      %p94 = por %p92, %p93
      %p95 = scmp.ne.s32.totalorder %s87, %s90
      %p96 = scmp.eq.s32.totalorder %s13, 0
      %p97 = por %p95, %p96
      %p98 = scmp.ne.s32.totalorder %s87, %s90
      %p99 = scmp.eq.s32.totalorder %s18, 1
      %p100 = por %p98, %p99
      %p101 = scmp.ne.s32.totalorder %s90, %s91
      %p102 = scmp.eq.s32.totalorder %s18, 0
      %p103 = por %p101, %p102
      %p104 = scmp.ne.s32.totalorder %s90, %s91
      %p105 = scmp.eq.s32.totalorder %s19, 1
      %p106 = por %p104, %p105
      %p108 = scmp.ne.s32.totalorder %s91, %s107
      %p109 = scmp.eq.s32.totalorder %s19, 0
      %p110 = por %p108, %p109
      %p111 = scmp.le.s32.totalorder 1, %s13
      %p112 = scmp.lt.s32.totalorder %s13, 3
      %p113 = pnand %p111, %p112
      %p114 = pneg %p113
      // Predicated region
      $region9: #{tpu_custom_call.1} parent=5 // pred_check
        _
      $region10: #{tpu_custom_call.1} parent=5 // pred_check_branch
        %116 = sbr.rel (%p113) target = $region12
      $region11: #{tpu_custom_call.1} parent=5 // pred_region
        %s117 = ssub.s32 %s13, 1
      $region12: #{tpu_custom_call.1} parent=5 // pred_fallthru
        _
      %p118 = scmp.lt.s32.totalorder %s13, 2
      // Predicated region
      $region13: #{tpu_custom_call.1} parent=5 // pred_check
        %p119 = pneg %p118
      $region14: #{tpu_custom_call.1} parent=5 // pred_check_branch
        %121 = sbr.rel (%p119) target = $region16
      $region15: #{tpu_custom_call.1} parent=5 // pred_region
        // Predicated region
        $region17: #{tpu_custom_call.1} parent=15 // pred_check
          %p122 = pneg %p65
        $region18: #{tpu_custom_call.1} parent=15 // pred_check_branch
          %124 = sbr.rel (%p122) target = $region20
        $region19: #{tpu_custom_call.1} parent=15 // pred_region
          %s125 = sand.u32 %s55, 1
          %s126 = scalar_lea.sflag [#allocation3], %s125
          %s127 = sand.u32 %s55, 1
          %s128 = smul.addr %s127, 64
          %s129 = scalar_lea.vmem [#allocation2], %s128
          %s130 = smul.u32 4, %s22
          %s131 = smul.u32 2, %s21
          %s133 = ssub.s32 1024, 1024
          %134 = vsyncadd %s126, %s133
          %s135 = sadd.s32 %s23, %s131
          %s136 = smul.addr %s130, 2
          %s137 = sadd.s32 %s135, %s136
          %s138 = smul.addr %s20, 8
          %s139 = sadd.s32 %s137, %s138
          %s140 = smul.addr %s139, 128
          %s141 = scalar_lea.hbm %s0, %s140
          %s142 = sshll.u32 %s129, 4
          %s143 = int_to_ptr.vmem [resolvable:$true] %s142
          %148 = dma.hbm_to_vmem [thread:$0]  %s141, 1024, %s143, %s126, 128, 128, 8
        $region20: #{tpu_custom_call.1} parent=15 // pred_fallthru
          _
      $region16: #{tpu_custom_call.1} parent=5 // pred_fallthru
        _
      %p149 = scmp.le.s32.totalorder 1, %s13
      %p150 = scmp.lt.s32.totalorder %s13, 3
      %p151 = pnand %p149, %p150
      %p152 = pneg %p151
      // Predicated region
      $region21: #{tpu_custom_call.1} parent=5 // pred_check
        _
      $region22: #{tpu_custom_call.1} parent=5 // pred_check_branch
        %154 = sbr.rel (%p151) target = $region24
      $region23: #{tpu_custom_call.1} parent=5 // pred_region
        %s155 = ssub.s32 %s13, 1
        %s156 = sand.u32 %s58, 1
        %s157 = scalar_lea.sflag [#allocation3], %s156
        %s158 = sand.u32 %s58, 1
        %s159 = smul.addr %s158, 64
        %s160 = scalar_lea.vmem [#allocation2], %s159
        // Predicated region
        $region25: #{tpu_custom_call.1} parent=23 // pred_check
          %p161 = pneg %p71
        $region26: #{tpu_custom_call.1} parent=23 // pred_check_branch
          %163 = sbr.rel (%p161) target = $region28
        $region27: #{tpu_custom_call.1} parent=23 // pred_region
          %164 = dma.done %s157, 1024
        $region28: #{tpu_custom_call.1} parent=23 // pred_fallthru
          _
        %s165 = sand.u32 %s58, 1
        %s166 = scalar_lea.sflag [#allocation3], %s165
        %s167 = sand.u32 %s58, 1
        %s168 = smul.addr %s167, 64
        %s169 = scalar_lea.vmem [#allocation2], %s168
        %p170 = pneg %p71
        %p171 = pneg %p68
        %p172 = pneg %p103
        %p173 = pneg %p100
        %s174 = sand.u32 %s90, 1
        %s175 = scalar_lea.sflag [#allocation4], %s174
        %s176 = sand.u32 %s90, 1
        %s177 = smul.addr %s176, 64
        %s178 = scalar_lea.vmem [#allocation5], %s177
        %s179 = smul.u32 4, %s26
        %s180 = smul.u32 2, %s25
        %s181 = smul.u32 16, %s25
        %v182 = vld [vmem:[%s160] sm:$0xff]
        %v183 = vld [vmem:[%s160 + $0x8] sm:$0xff]
        %v184 = vld [vmem:[%s160 + $0x10] sm:$0xff]
        %v185 = vld [vmem:[%s160 + $0x18] sm:$0xff]
        %v186 = vld [vmem:[%s160 + $0x20] sm:$0xff]
        %v187 = vld [vmem:[%s160 + $0x28] sm:$0xff]
        %v188 = vld [vmem:[%s160 + $0x30] sm:$0xff]
        %v189 = vld [vmem:[%s160 + $0x38] sm:$0xff]
        %v190 = vcombine.low %v182, %v186
        %v191 = vcombine.high %v182, %v186
        %v193 = vunpack.c.l.s4 1983009808
        %v194 = vunpack.c.0.s8 %v193
        %v195 = vlaneseq
        %v196 = vshrl.u32 %v195, 7
        %v197 = vsub.s32 %v194, %v196
        %v198 = vrot.slane %v190, %v197
        %v200 = vunpack.c.l.s4 1983009808
        %v201 = vunpack.c.0.s8 %v200
        %v202 = vlaneseq
        %v203 = vshrl.u32 %v202, 7
        %v204 = vsub.s32 %v201, %v203
        %v205 = vrot.slane %v191, %v204
        %v206 = vcombine.low %v184, %v188
        %v207 = vcombine.high %v184, %v188
        %v209 = vunpack.c.l.s4 1983009808
        %v210 = vunpack.c.0.s8 %v209
        %v211 = vlaneseq
        %v212 = vshrl.u32 %v211, 7
        %v213 = vsub.s32 %v210, %v212
        %v214 = vrot.slane %v206, %v213
        %v216 = vunpack.c.l.s4 1983009808
        %v217 = vunpack.c.0.s8 %v216
        %v218 = vlaneseq
        %v219 = vshrl.u32 %v218, 7
        %v220 = vsub.s32 %v217, %v219
        %v221 = vrot.slane %v207, %v220
        %v222 = vcombine.low %v198, %v214
        %v223 = vcombine.high %v198, %v214
        %v225 = vunpack.c.l.s4 1934713408
        %v226 = vunpack.c.0.s8 %v225
        %v227 = vlaneseq
        %v228 = vshrl.u32 %v227, 7
        %v229 = vsub.s32 %v226, %v228
        %v230 = vrot.slane %v222, %v229
        %v232 = vunpack.c.l.s4 1934713408
        %v233 = vunpack.c.0.s8 %v232
        %v234 = vlaneseq
        %v235 = vshrl.u32 %v234, 7
        %v236 = vsub.s32 %v233, %v235
        %v237 = vrot.slane %v223, %v236
        %v238 = vcombine.low %v205, %v221
        %v239 = vcombine.high %v205, %v221
        %v241 = vunpack.c.l.s4 1934713408
        %v242 = vunpack.c.0.s8 %v241
        %v243 = vlaneseq
        %v244 = vshrl.u32 %v243, 7
        %v245 = vsub.s32 %v242, %v244
        %v246 = vrot.slane %v238, %v245
        %v248 = vunpack.c.l.s4 1934713408
        %v249 = vunpack.c.0.s8 %v248
        %v250 = vlaneseq
        %v251 = vshrl.u32 %v250, 7
        %v252 = vsub.s32 %v249, %v251
        %v253 = vrot.slane %v239, %v252
        %v254 = vcombine.high %v230, 0.0
        %v255 = vcombine.high %v237, 0.0
        %v256 = vcombine.high %v246, 0.0
        %v257 = vcombine.high %v253, 0.0
        %v258 = vcombine.low %v183, %v187
        %v259 = vcombine.high %v183, %v187
        %v261 = vunpack.c.l.s4 1983009808
        %v262 = vunpack.c.0.s8 %v261
        %v263 = vlaneseq
        %v264 = vshrl.u32 %v263, 7
        %v265 = vsub.s32 %v262, %v264
        %v266 = vrot.slane %v258, %v265
        %v268 = vunpack.c.l.s4 1983009808
        %v269 = vunpack.c.0.s8 %v268
        %v270 = vlaneseq
        %v271 = vshrl.u32 %v270, 7
        %v272 = vsub.s32 %v269, %v271
        %v273 = vrot.slane %v259, %v272
        %v274 = vcombine.low %v185, %v189
        %v275 = vcombine.high %v185, %v189
        %v277 = vunpack.c.l.s4 1983009808
        %v278 = vunpack.c.0.s8 %v277
        %v279 = vlaneseq
        %v280 = vshrl.u32 %v279, 7
        %v281 = vsub.s32 %v278, %v280
        %v282 = vrot.slane %v274, %v281
        %v284 = vunpack.c.l.s4 1983009808
        %v285 = vunpack.c.0.s8 %v284
        %v286 = vlaneseq
        %v287 = vshrl.u32 %v286, 7
        %v288 = vsub.s32 %v285, %v287
        %v289 = vrot.slane %v275, %v288
        %v290 = vcombine.low %v266, %v282
        %v291 = vcombine.high %v266, %v282
        %v293 = vunpack.c.l.s4 1934713408
        %v294 = vunpack.c.0.s8 %v293
        %v295 = vlaneseq
        %v296 = vshrl.u32 %v295, 7
        %v297 = vsub.s32 %v294, %v296
        %v298 = vrot.slane %v290, %v297
        %v300 = vunpack.c.l.s4 1934713408
        %v301 = vunpack.c.0.s8 %v300
        %v302 = vlaneseq
        %v303 = vshrl.u32 %v302, 7
        %v304 = vsub.s32 %v301, %v303
        %v305 = vrot.slane %v291, %v304
        %v306 = vcombine.low %v273, %v289
        %v307 = vcombine.high %v273, %v289
        %v309 = vunpack.c.l.s4 1934713408
        %v310 = vunpack.c.0.s8 %v309
        %v311 = vlaneseq
        %v312 = vshrl.u32 %v311, 7
        %v313 = vsub.s32 %v310, %v312
        %v314 = vrot.slane %v306, %v313
        %v316 = vunpack.c.l.s4 1934713408
        %v317 = vunpack.c.0.s8 %v316
        %v318 = vlaneseq
        %v319 = vshrl.u32 %v318, 7
        %v320 = vsub.s32 %v317, %v319
        %v321 = vrot.slane %v307, %v320
        %v322 = vcombine.high %v298, 0.0
        %v323 = vcombine.high %v305, 0.0
        %v324 = vcombine.high %v314, 0.0
        %v325 = vcombine.high %v321, 0.0
        %vm326 = vcmask 125952
        %327 = vst.msk [vmem:[%s178] sm:$0xf] %vm326, %v230
        %328 = vst.msk [vmem:[%s178 + $0x4] sm:$0xf] %vm326, %v254
        %329 = vst.msk [vmem:[%s178 + $0x8] sm:$0xf] %vm326, %v237
        %330 = vst.msk [vmem:[%s178 + $0xc] sm:$0xf] %vm326, %v255
        %331 = vst.msk [vmem:[%s178 + $0x10] sm:$0xf] %vm326, %v246
        %332 = vst.msk [vmem:[%s178 + $0x14] sm:$0xf] %vm326, %v256
        %333 = vst.msk [vmem:[%s178 + $0x18] sm:$0xf] %vm326, %v253
        %334 = vst.msk [vmem:[%s178 + $0x1c] sm:$0xf] %vm326, %v257
        %335 = vst.msk [vmem:[%s178 + $0x20] sm:$0xf] %vm326, %v298
        %336 = vst.msk [vmem:[%s178 + $0x24] sm:$0xf] %vm326, %v322
        %337 = vst.msk [vmem:[%s178 + $0x28] sm:$0xf] %vm326, %v305
        %338 = vst.msk [vmem:[%s178 + $0x2c] sm:$0xf] %vm326, %v323
        %339 = vst.msk [vmem:[%s178 + $0x30] sm:$0xf] %vm326, %v314
        %340 = vst.msk [vmem:[%s178 + $0x34] sm:$0xf] %vm326, %v324
        %341 = vst.msk [vmem:[%s178 + $0x38] sm:$0xf] %vm326, %v321
        %342 = vst.msk [vmem:[%s178 + $0x3c] sm:$0xf] %vm326, %v325
        %s343 = sand.u32 %s90, 1
        %s344 = scalar_lea.sflag [#allocation4], %s343
        %s345 = sand.u32 %s90, 1
        %s346 = smul.addr %s345, 64
        %s347 = scalar_lea.vmem [#allocation5], %s346
        // Predicated region
        $region29: #{tpu_custom_call.1} parent=23 // pred_check
          %p348 = pneg %p100
        $region30: #{tpu_custom_call.1} parent=23 // pred_check_branch
          %350 = sbr.rel (%p348) target = $region32
        $region31: #{tpu_custom_call.1} parent=23 // pred_region
          %s351 = smul.u32 16, %s25
          %s353 = ssub.s32 1024, 1024
          %354 = vsyncadd %s344, %s353
          %s355 = sadd.s32 %s27, %s26
          %s356 = sadd.s32 %s355, %s351
          %s357 = smul.addr %s24, 16
          %s358 = sadd.s32 %s356, %s357
          %s359 = smul.addr %s358, 64
          %s360 = scalar_lea.hbm %s1, %s359
          %s361 = sshll.u32 %s347, 4
          %s362 = int_to_ptr.vmem [resolvable:$true] %s361
          %367 = dma.vmem_to_hbm [thread:$0]  %s362, 1024, %s360, %s344, 64, 64, 4
        $region32: #{tpu_custom_call.1} parent=23 // pred_fallthru
          _
      $region24: #{tpu_custom_call.1} parent=5 // pred_fallthru
        _
      %p368 = scmp.le.s32.totalorder 2, %s13
      // Predicated region
      $region33: #{tpu_custom_call.1} parent=5 // pred_check
        %p369 = pneg %p368
      $region34: #{tpu_custom_call.1} parent=5 // pred_check_branch
        %371 = sbr.rel (%p369) target = $region36
      $region35: #{tpu_custom_call.1} parent=5 // pred_region
        %s372 = ssub.s32 %s13, 2
        // Predicated region
        $region37: #{tpu_custom_call.1} parent=35 // pred_check
          %p373 = pneg %p106
        $region38: #{tpu_custom_call.1} parent=35 // pred_check_branch
          %375 = sbr.rel (%p373) target = $region40
        $region39: #{tpu_custom_call.1} parent=35 // pred_region
          %s376 = sand.u32 %s91, 1
          %s377 = scalar_lea.sflag [#allocation4], %s376
          %s378 = sand.u32 %s91, 1
          %s379 = smul.addr %s378, 64
          %s380 = scalar_lea.vmem [#allocation5], %s379
          %381 = dma.done %s377, 1024
        $region40: #{tpu_custom_call.1} parent=35 // pred_fallthru
          _
      $region36: #{tpu_custom_call.1} parent=5 // pred_fallthru
        _
    $region6: #{tpu_custom_call.1} parent=1 // loop_footer
      %s17 = sadd.s32 1, %s13
    $region7: #{tpu_custom_call.1} parent=1 // loop_footer_branch
      %12 = sbr.rel target = $region3
    $region8: #{tpu_custom_call.1} parent=1 // loop_exit
      _
    %382 = vsyncpa [#allocation3], 1
    %s383 = scalar_lea.sflag [#allocation3], 1
    %384 = vsyncpa %s383, 1
    %385 = vsyncpa [#allocation4], 1
    %s386 = scalar_lea.sflag [#allocation4], 1
    %387 = vsyncpa %s386, 1

</llo_original>
